<compile_context>
chip_gen: v7x
topology: tpu7x:2x2x1
jax: 0.10.0
libtpu: 0.0.40
codegen_flags: <defaults>
</compile_context>

<pallas_src>
import functools
import math

import jax
import jax.numpy as jnp
from jax.experimental import pallas as pl
from jax.experimental.pallas import tpu as pltpu

# Large finite negative (avoids -inf arithmetic); exp(MASK - m) underflows to 0.
_MASK_VALUE = -0.7 * float(jnp.finfo(jnp.float32).max)


def _flash_sdpa_kernel(q_ref, k_ref, v_ref, o_ref, m_sc, l_sc, acc_sc, q_sc,
                       *, skv_actual, mask_kv):
    """One (head-group, q-tile, kv-tile) flash-attention step.

    NOTE: correctness relies on the KV axis being the innermost grid axis
    (init gated on kv_idx == 0, finalize on the last kv step).
    """
    kv_idx = pl.program_id(2)
    hblk, tq, d = q_ref.shape
    tk = k_ref.shape[1]
    mxu_dt = q_sc.dtype

    @pl.when(kv_idx == 0)
    def _init():
        m_sc[...] = jnp.full(m_sc.shape, _MASK_VALUE, m_sc.dtype)
        l_sc[...] = jnp.zeros(l_sc.shape, l_sc.dtype)
        acc_sc[...] = jnp.zeros(acc_sc.shape, acc_sc.dtype)
        # Fold 1/sqrt(d_k) into Q once per Q tile (not once per KV step) and
        # stage it in the MXU input dtype.
        scale = 1.0 / math.sqrt(d)
        q_sc[...] = (q_ref[...] * scale).astype(mxu_dt)

    q = q_sc[...]                                    # (hblk, tq, D), pre-scaled
    k = k_ref[...].astype(mxu_dt)                    # (hblk, tk, D)

    # scores = (Q/sqrt(d)) K^T: contract over D for both operands (no explicit
    # transpose of K); bf16 operands, f32 accumulation on the MXU.
    s = jnp.einsum("hqd,hkd->hqk", q, k, preferred_element_type=jnp.float32)

    if mask_kv:
        # Mask padded KV columns (only the last KV tile actually has any).
        col = kv_idx * tk + jax.lax.broadcasted_iota(jnp.int32, s.shape, 2)
        s = jnp.where(col < skv_actual, s, _MASK_VALUE)

    # Online (streaming) softmax update, all state in f32.
    m_prev = m_sc[...]                               # (hblk, tq, 1)
    m_new = jnp.maximum(m_prev, s.max(axis=-1, keepdims=True))
    alpha = jnp.exp(m_prev - m_new)
    p = jnp.exp(s - m_new)                           # f32 exp on the EUP
    l_sc[...] = alpha * l_sc[...] + p.sum(axis=-1, keepdims=True)
    acc_sc[...] = alpha * acc_sc[...] + jnp.einsum(
        "hqk,hkd->hqd", p.astype(mxu_dt), v_ref[...].astype(mxu_dt),
        preferred_element_type=jnp.float32)
    m_sc[...] = m_new

    @pl.when(kv_idx == pl.num_programs(2) - 1)
    def _finalize():
        inv_l = 1.0 / l_sc[...]          # exact; runs once per Q tile -> free
        norm = acc_sc[...] * inv_l       # (hblk, tq, D) f32
        # Pack the heads onto the lane axis of the output block so the output
        # slab / HBM writeback is hblk*D (>=128 for D<128) lanes wide.
        for h in range(hblk):            # static tiny loop (hblk <= ~4)
            o_ref[0, :, h * d:(h + 1) * d] = norm[h].astype(o_ref.dtype)


def _round_up(x, m):
    return (x + m - 1) // m * m


def _pick_tile(n, target, align):
    """Tile size for a sequence axis of length n (axis is padded to a multiple)."""
    target = max(align, (target // align) * align)
    na = _round_up(n, align)
    if na <= target:
        return na
    floor_t = max(align, min(target, 128))
    t = target
    # Shrink the tile while the padding it would force exceeds ~25% of n.
    while t // 2 >= floor_t and (_round_up(n, t) - n) * 4 > n:
        t //= 2
    return t


def _pick_head_block(bh, d, n_q_tiles):
    """Heads per grid step: aim for >=128 output lanes, but keep at least
    2 parallel grid steps when possible (v7x has 2 TensorCores)."""
    want = max(1, min(bh, -(-128 // max(d, 1))))          # ceil(128 / D)
    divs = [x for x in range(bh, 0, -1) if bh % x == 0]
    hblk = next(x for x in divs if x <= want)
    if (bh // hblk) * n_q_tiles < 2:
        for x in divs:
            if x <= want and (bh // x) * n_q_tiles >= 2:
                hblk = x
                break
    return hblk


def scaled_dot_product_attention(Q, K, V, *, q_tile=512, kv_tile=256,
                                 mxu_dtype=jnp.bfloat16):
    """softmax(Q K^T / sqrt(D), -1) @ V.  Q: [..., Sq, D], K/V: [..., Skv, D]."""
    *lead, Sq, D = Q.shape
    Skv = K.shape[-2]
    BH = 1
    for x in lead:
        BH *= x

    q = Q.reshape(BH, Sq, D)
    k = K.reshape(BH, Skv, D)
    v = V.reshape(BH, Skv, D)

    itemsize = jnp.dtype(Q.dtype).itemsize
    seq_align = 8 if itemsize >= 4 else 16

    tq = _pick_tile(Sq, q_tile, seq_align)
    tk = _pick_tile(Skv, kv_tile, seq_align)   # default kv_tile keeps tk 128-aligned
    sq_p = _round_up(Sq, tq)
    skv_p = _round_up(Skv, tk)

    # Pad ragged lengths; padded KV columns are masked inside the kernel,
    # padded Q rows are sliced off at the end.
    if sq_p != Sq:
        q = jnp.pad(q, ((0, 0), (0, sq_p - Sq), (0, 0)))
    if skv_p != Skv:
        k = jnp.pad(k, ((0, 0), (0, skv_p - Skv), (0, 0)))
        v = jnp.pad(v, ((0, 0), (0, skv_p - Skv), (0, 0)))

    n_q = sq_p // tq
    hblk = _pick_head_block(BH, D, n_q)
    grid = (BH // hblk, n_q, skv_p // tk)      # KV reduction axis LAST

    q_spec = pl.BlockSpec((hblk, tq, D), lambda g, qi, ki: (g, qi, 0))
    kv_spec = pl.BlockSpec((hblk, tk, D), lambda g, qi, ki: (g, ki, 0))
    # Lane-dense output: heads packed onto the lane axis (hblk*D lanes).
    o_spec = pl.BlockSpec((1, tq, hblk * D), lambda g, qi, ki: (g, qi, 0))

    # Scoped-VMEM budget with headroom, capped at 32 MiB so it is safe on
    # v7x (64 MiB physical / 32 MiB scoped default) as well as v5e/v6e.
    mxu_item = jnp.dtype(mxu_dtype).itemsize
    blk_bytes = hblk * (tq + 2 * tk) * D * itemsize        # q + k + v tiles
    out_bytes = tq * hblk * D * itemsize
    scratch_bytes = hblk * tq * (D * (4 + mxu_item) + 8)   # acc + qs + m + l
    scores_bytes = hblk * tq * tk * 4
    est = 2 * (blk_bytes + out_bytes) + scratch_bytes + 3 * scores_bytes
    vmem_limit = int(min(32 * 1024 * 1024, max(16 * 1024 * 1024, 2 * est)))

    kernel = functools.partial(_flash_sdpa_kernel,
                               skv_actual=Skv, mask_kv=(skv_p != Skv))

    out = pl.pallas_call(
        kernel,
        out_shape=jax.ShapeDtypeStruct((BH // hblk, sq_p, hblk * D), Q.dtype),
        grid_spec=pltpu.PrefetchScalarGridSpec(
            num_scalar_prefetch=0,
            grid=grid,
            in_specs=[q_spec, kv_spec, kv_spec],
            out_specs=o_spec,
            scratch_shapes=[
                pltpu.VMEM((hblk, tq, 1), jnp.float32),    # running max m
                pltpu.VMEM((hblk, tq, 1), jnp.float32),    # running sum l
                pltpu.VMEM((hblk, tq, D), jnp.float32),    # f32 accumulator
                pltpu.VMEM((hblk, tq, D), mxu_dtype),      # pre-scaled Q
            ],
        ),
        compiler_params=pltpu.CompilerParams(
            dimension_semantics=("parallel", "parallel", "arbitrary"),
            vmem_limit_bytes=vmem_limit,
        ),
    )(q, k, v)

    # Un-pack heads from the lane axis and drop Q padding.
    out = out.reshape(BH // hblk, sq_p, hblk, D)
    out = jnp.swapaxes(out, 1, 2).reshape(BH, sq_p, D)[:, :Sq, :]
    return out.reshape(*lead, Sq, D)


def _reference(Q, K, V):
    d_k = Q.shape[-1]
    scores = jnp.einsum("...qd,...kd->...qk", Q, K) / math.sqrt(d_k)
    p = jax.nn.softmax(scores, axis=-1)
    return jnp.einsum("...qk,...kd->...qd", p, V)


if __name__ == "__main__":
    key = jax.random.PRNGKey(0)
    kq, kk, kv = jax.random.split(key, 3)

    # Small shape consistent with the module (single-KV-tile path).
    B, H, S, D = 2, 2, 8, 32
    Q = jax.random.normal(kq, (B, H, S, D), dtype=jnp.float32)
    K = jax.random.normal(kk, (B, H, S, D), dtype=jnp.float32)
    V = jax.random.normal(kv, (B, H, S, D), dtype=jnp.float32)

    out = jax.block_until_ready(scaled_dot_product_attention(Q, K, V))
    ref = _reference(Q, K, V)
    assert out.shape == (B, H, S, D)
    # bf16 MXU path with f32 accumulation -> ~1e-3..1e-2 level agreement.
    assert jnp.allclose(out, ref, atol=2e-2, rtol=2e-2), "mismatch vs reference"

    # Multi-KV-tile path exercising the online softmax across grid steps.
    B2, H2, S2, D2 = 1, 2, 64, 32
    kq2, kk2, kv2 = jax.random.split(jax.random.PRNGKey(1), 3)
    Q2 = jax.random.normal(kq2, (B2, H2, S2, D2), dtype=jnp.float32)
    K2 = jax.random.normal(kk2, (B2, H2, S2, D2), dtype=jnp.float32)
    V2 = jax.random.normal(kv2, (B2, H2, S2, D2), dtype=jnp.float32)
    out2 = jax.block_until_ready(
        scaled_dot_product_attention(Q2, K2, V2, q_tile=16, kv_tile=16))
    assert jnp.allclose(out2, _reference(Q2, K2, V2), atol=2e-2, rtol=2e-2), \
        "tiled mismatch"

    # Ragged lengths exercising the pad + KV-mask path.
    B3, H3, Sq3, Skv3, D3 = 1, 2, 40, 56, 32
    kq3, kk3, kv3 = jax.random.split(jax.random.PRNGKey(2), 3)
    Q3 = jax.random.normal(kq3, (B3, H3, Sq3, D3), dtype=jnp.float32)
    K3 = jax.random.normal(kk3, (B3, H3, Skv3, D3), dtype=jnp.float32)
    V3 = jax.random.normal(kv3, (B3, H3, Skv3, D3), dtype=jnp.float32)
    out3 = jax.block_until_ready(
        scaled_dot_product_attention(Q3, K3, V3, q_tile=16, kv_tile=16))
    assert jnp.allclose(out3, _reference(Q3, K3, V3), atol=2e-2, rtol=2e-2), \
        "ragged mismatch"

    print("KERNEL_OK")
</pallas_src>

<mosaic_0001>
module attributes {stable_mosaic.version = 11 : i64} {
  func.func @_flash_sdpa_kernel(%arg0: i32, %arg1: i32, %arg2: i32, %arg3: memref<2x8x32xf32, #tpu.memory_space<vmem>>, %arg4: memref<2x8x32xf32, #tpu.memory_space<vmem>>, %arg5: memref<2x8x32xf32, #tpu.memory_space<vmem>>, %arg6: memref<1x8x64xf32, #tpu.memory_space<vmem>>, %arg7: memref<2x8x1xf32, #tpu.memory_space<vmem>>, %arg8: memref<2x8x1xf32, #tpu.memory_space<vmem>>, %arg9: memref<2x8x32xf32, #tpu.memory_space<vmem>>, %arg10: memref<2x8x32xbf16, #tpu.memory_space<vmem>>) attributes {dimension_semantics = [#tpu.dimension_semantics<parallel>, #tpu.dimension_semantics<parallel>, #tpu.dimension_semantics<arbitrary>], iteration_bounds = array<i64: 2, 1, 1>, scalar_prefetch = 0 : i64, scratch_operands = 4 : i64, tpu.core_type = #tpu.core_type<tc>, window_params = [{transform_indices = @transform_0, window_bounds = array<i64: 2, 8, 32>}, {transform_indices = @transform_1, window_bounds = array<i64: 2, 8, 32>}, {transform_indices = @transform_2, window_bounds = array<i64: 2, 8, 32>}, {transform_indices = @transform_3, window_bounds = array<i64: 1, 8, 64>}]} {
    %c0_i32 = arith.constant 0 : i32
    %0 = arith.cmpi eq, %arg2, %c0_i32 : i32
    %1 = arith.extui %0 : i1 to i32
    %c0_i32_0 = arith.constant 0 : i32
    %2 = arith.cmpi ne, %1, %c0_i32_0 : i32
    scf.if %2 {
      %cst_32 = arith.constant -2.38197633E+38 : f32
      %35 = vector.broadcast %cst_32 : f32 to vector<2x8x1xf32>
      %c0_33 = arith.constant 0 : index
      %c0_34 = arith.constant 0 : index
      %c0_35 = arith.constant 0 : index
      %36 = vector.load %arg7[%c0_33, %c0_34, %c0_35] : memref<2x8x1xf32, #tpu.memory_space<vmem>>, vector<2x8x1xf32>
      tpu.vector_store %arg7[%c0_33, %c0_34, %c0_35], %35 {strides = array<i32>} : memref<2x8x1xf32, #tpu.memory_space<vmem>>, vector<2x8x1xf32>,
      %cst_36 = arith.constant 0.000000e+00 : f32
      %37 = vector.broadcast %cst_36 : f32 to vector<2x8x1xf32>
      %c0_37 = arith.constant 0 : index
      %c0_38 = arith.constant 0 : index
      %c0_39 = arith.constant 0 : index
      %38 = vector.load %arg8[%c0_37, %c0_38, %c0_39] : memref<2x8x1xf32, #tpu.memory_space<vmem>>, vector<2x8x1xf32>
      tpu.vector_store %arg8[%c0_37, %c0_38, %c0_39], %37 {strides = array<i32>} : memref<2x8x1xf32, #tpu.memory_space<vmem>>, vector<2x8x1xf32>,
      %cst_40 = arith.constant 0.000000e+00 : f32
      %39 = vector.broadcast %cst_40 : f32 to vector<2x8x32xf32>
      %c0_41 = arith.constant 0 : index
      %c0_42 = arith.constant 0 : index
      %c0_43 = arith.constant 0 : index
      %40 = vector.load %arg9[%c0_41, %c0_42, %c0_43] : memref<2x8x32xf32, #tpu.memory_space<vmem>>, vector<2x8x32xf32>
      tpu.vector_store %arg9[%c0_41, %c0_42, %c0_43], %39 {strides = array<i32>} : memref<2x8x32xf32, #tpu.memory_space<vmem>>, vector<2x8x32xf32>,
      %c0_44 = arith.constant 0 : index
      %c0_45 = arith.constant 0 : index
      %c0_46 = arith.constant 0 : index
      %41 = vector.load %arg3[%c0_44, %c0_45, %c0_46] : memref<2x8x32xf32, #tpu.memory_space<vmem>>, vector<2x8x32xf32>
      %cst_47 = arith.constant 0.176776692 : f32
      %42 = vector.broadcast %cst_47 : f32 to vector<2x8x32xf32>
      %43 = arith.mulf %41, %42 : vector<2x8x32xf32>
      %44 = arith.truncf %43 : vector<2x8x32xf32> to vector<2x8x32xbf16>
      %c0_48 = arith.constant 0 : index
      %c0_49 = arith.constant 0 : index
      %c0_50 = arith.constant 0 : index
      %45 = vector.load %arg10[%c0_48, %c0_49, %c0_50] : memref<2x8x32xbf16, #tpu.memory_space<vmem>>, vector<2x8x32xbf16>
      tpu.vector_store %arg10[%c0_48, %c0_49, %c0_50], %44 {strides = array<i32>} : memref<2x8x32xbf16, #tpu.memory_space<vmem>>, vector<2x8x32xbf16>,
    } else {
    }
    %c0 = arith.constant 0 : index
    %c0_1 = arith.constant 0 : index
    %c0_2 = arith.constant 0 : index
    %3 = vector.load %arg10[%c0, %c0_1, %c0_2] : memref<2x8x32xbf16, #tpu.memory_space<vmem>>, vector<2x8x32xbf16>
    %c0_3 = arith.constant 0 : index
    %c0_4 = arith.constant 0 : index
    %c0_5 = arith.constant 0 : index
    %4 = vector.load %arg4[%c0_3, %c0_4, %c0_5] : memref<2x8x32xf32, #tpu.memory_space<vmem>>, vector<2x8x32xf32>
    %5 = arith.truncf %4 : vector<2x8x32xf32> to vector<2x8x32xbf16>
    "tpu.trace_start"() <{level = 10 : i32, message = "hqd,hkd->hqk"}> : () -> ()
    %cst = arith.constant dense<0.000000e+00> : vector<2x8x8xf32>
    %6 = tpu.matmul %3, %5, %cst {dimension_numbers = #tpu.dot_dimension_numbers<[2], [2], [1], [1], [0, 0, 0, 1, 1, 1], [0], [0]>} : vector<2x8x32xbf16>, vector<2x8x32xbf16>, vector<2x8x8xf32> -> vector<2x8x8xf32>
    "tpu.trace_stop"() : () -> ()
    %c0_6 = arith.constant 0 : index
    %c0_7 = arith.constant 0 : index
    %c0_8 = arith.constant 0 : index
    %7 = vector.load %arg7[%c0_6, %c0_7, %c0_8] : memref<2x8x1xf32, #tpu.memory_space<vmem>>, vector<2x8x1xf32>
    %cst_9 = arith.constant dense<0xFF800000> : vector<2x8xf32>
    %8 = vector.multi_reduction <maximumf>, %6, %cst_9 [2] : vector<2x8x8xf32> to vector<2x8xf32>
    %9 = vector.shape_cast %8 : vector<2x8xf32> to vector<2x8x1xf32>
    %10 = arith.maximumf %7, %9 : vector<2x8x1xf32>
    %11 = arith.subf %7, %10 : vector<2x8x1xf32>
    %12 = math.exp %11 : vector<2x8x1xf32>
    %13 = vector.broadcast %10 : vector<2x8x1xf32> to vector<2x8x8xf32>
    %14 = arith.subf %6, %13 : vector<2x8x8xf32>
    %15 = math.exp %14 : vector<2x8x8xf32>
    %c0_10 = arith.constant 0 : index
    %c0_11 = arith.constant 0 : index
    %c0_12 = arith.constant 0 : index
    %16 = vector.load %arg8[%c0_10, %c0_11, %c0_12] : memref<2x8x1xf32, #tpu.memory_space<vmem>>, vector<2x8x1xf32>
    %17 = arith.mulf %12, %16 : vector<2x8x1xf32>
    %cst_13 = arith.constant dense<0.000000e+00> : vector<2x8xf32>
    %18 = vector.multi_reduction <add>, %15, %cst_13 [2] : vector<2x8x8xf32> to vector<2x8xf32>
    %19 = vector.shape_cast %18 : vector<2x8xf32> to vector<2x8x1xf32>
    %20 = arith.addf %17, %19 : vector<2x8x1xf32>
    %c0_14 = arith.constant 0 : index
    %c0_15 = arith.constant 0 : index
    %c0_16 = arith.constant 0 : index
    %21 = vector.load %arg8[%c0_14, %c0_15, %c0_16] : memref<2x8x1xf32, #tpu.memory_space<vmem>>, vector<2x8x1xf32>
    tpu.vector_store %arg8[%c0_14, %c0_15, %c0_16], %20 {strides = array<i32>} : memref<2x8x1xf32, #tpu.memory_space<vmem>>, vector<2x8x1xf32>,
    %c0_17 = arith.constant 0 : index
    %c0_18 = arith.constant 0 : index
    %c0_19 = arith.constant 0 : index
    %22 = vector.load %arg9[%c0_17, %c0_18, %c0_19] : memref<2x8x32xf32, #tpu.memory_space<vmem>>, vector<2x8x32xf32>
    %23 = vector.broadcast %12 : vector<2x8x1xf32> to vector<2x8x32xf32>
    %24 = arith.mulf %23, %22 : vector<2x8x32xf32>
    %25 = arith.truncf %15 : vector<2x8x8xf32> to vector<2x8x8xbf16>
    %c0_20 = arith.constant 0 : index
    %c0_21 = arith.constant 0 : index
    %c0_22 = arith.constant 0 : index
    %26 = vector.load %arg5[%c0_20, %c0_21, %c0_22] : memref<2x8x32xf32, #tpu.memory_space<vmem>>, vector<2x8x32xf32>
    %27 = arith.truncf %26 : vector<2x8x32xf32> to vector<2x8x32xbf16>
    "tpu.trace_start"() <{level = 10 : i32, message = "hqk,hkd->hqd"}> : () -> ()
    %cst_23 = arith.constant dense<0.000000e+00> : vector<2x8x32xf32>
    %28 = tpu.matmul %25, %27, %cst_23 {dimension_numbers = #tpu.dot_dimension_numbers<[2], [1], [1], [2], [0, 0, 0, 1, 1, 2], [0], [0]>} : vector<2x8x8xbf16>, vector<2x8x32xbf16>, vector<2x8x32xf32> -> vector<2x8x32xf32>
    "tpu.trace_stop"() : () -> ()
    %29 = arith.addf %24, %28 : vector<2x8x32xf32>
    %c0_24 = arith.constant 0 : index
    %c0_25 = arith.constant 0 : index
    %c0_26 = arith.constant 0 : index
    %30 = vector.load %arg9[%c0_24, %c0_25, %c0_26] : memref<2x8x32xf32, #tpu.memory_space<vmem>>, vector<2x8x32xf32>
    tpu.vector_store %arg9[%c0_24, %c0_25, %c0_26], %29 {strides = array<i32>} : memref<2x8x32xf32, #tpu.memory_space<vmem>>, vector<2x8x32xf32>,
    %c0_27 = arith.constant 0 : index
    %c0_28 = arith.constant 0 : index
    %c0_29 = arith.constant 0 : index
    %31 = vector.load %arg7[%c0_27, %c0_28, %c0_29] : memref<2x8x1xf32, #tpu.memory_space<vmem>>, vector<2x8x1xf32>
    tpu.vector_store %arg7[%c0_27, %c0_28, %c0_29], %10 {strides = array<i32>} : memref<2x8x1xf32, #tpu.memory_space<vmem>>, vector<2x8x1xf32>,
    %c0_i32_30 = arith.constant 0 : i32
    %32 = arith.cmpi eq, %arg2, %c0_i32_30 : i32
    %33 = arith.extui %32 : i1 to i32
    %c0_i32_31 = arith.constant 0 : i32
    %34 = arith.cmpi ne, %33, %c0_i32_31 : i32
    scf.if %34 {
      %c0_32 = arith.constant 0 : index
      %c0_33 = arith.constant 0 : index
      %c0_34 = arith.constant 0 : index
      %35 = vector.load %arg8[%c0_32, %c0_33, %c0_34] : memref<2x8x1xf32, #tpu.memory_space<vmem>>, vector<2x8x1xf32>
      %cst_35 = arith.constant 1.000000e+00 : f32
      %36 = vector.broadcast %cst_35 : f32 to vector<2x8x1xf32>
      %37 = arith.divf %36, %35 : vector<2x8x1xf32>
      %c0_36 = arith.constant 0 : index
      %c0_37 = arith.constant 0 : index
      %c0_38 = arith.constant 0 : index
      %38 = vector.load %arg9[%c0_36, %c0_37, %c0_38] : memref<2x8x32xf32, #tpu.memory_space<vmem>>, vector<2x8x32xf32>
      %39 = vector.broadcast %37 : vector<2x8x1xf32> to vector<2x8x32xf32>
      %40 = arith.mulf %38, %39 : vector<2x8x32xf32>
      %41 = vector.extract_strided_slice %40 {offsets = [0, 0, 0], sizes = [1, 8, 32], strides = [1, 1, 1]} : vector<2x8x32xf32> to vector<1x8x32xf32>
      %42 = vector.shape_cast %41 : vector<1x8x32xf32> to vector<8x32xf32>
      %c0_39 = arith.constant 0 : index
      %c0_40 = arith.constant 0 : index
      %c0_41 = arith.constant 0 : index
      %43 = vector.load %arg6[%c0_39, %c0_40, %c0_41] : memref<1x8x64xf32, #tpu.memory_space<vmem>>, vector<1x8x32xf32>
      %44 = vector.shape_cast %43 : vector<1x8x32xf32> to vector<8x32xf32>
      %45 = vector.shape_cast %42 : vector<8x32xf32> to vector<1x8x32xf32>
      tpu.vector_store %arg6[%c0_39, %c0_40, %c0_41], %45 {strides = array<i32>} : memref<1x8x64xf32, #tpu.memory_space<vmem>>, vector<1x8x32xf32>,
      %46 = vector.extract_strided_slice %40 {offsets = [1, 0, 0], sizes = [1, 8, 32], strides = [1, 1, 1]} : vector<2x8x32xf32> to vector<1x8x32xf32>
      %47 = vector.shape_cast %46 : vector<1x8x32xf32> to vector<8x32xf32>
      %c0_42 = arith.constant 0 : index
      %c0_43 = arith.constant 0 : index
      %c32 = arith.constant 32 : index
      %48 = vector.load %arg6[%c0_42, %c0_43, %c32] : memref<1x8x64xf32, #tpu.memory_space<vmem>>, vector<1x8x32xf32>
      %49 = vector.shape_cast %48 : vector<1x8x32xf32> to vector<8x32xf32>
      %50 = vector.shape_cast %47 : vector<8x32xf32> to vector<1x8x32xf32>
      tpu.vector_store %arg6[%c0_42, %c0_43, %c32], %50 {strides = array<i32>} : memref<1x8x64xf32, #tpu.memory_space<vmem>>, vector<1x8x32xf32>,
    } else {
    }
    return
  }
  func.func @transform_0(%arg0: i32, %arg1: i32, %arg2: i32) -> (i32, i32, i32) {
    %c0_i32 = arith.constant 0 : i32
    %c0_i32_0 = arith.constant 0 : i32
    return %arg0, %arg1, %c0_i32 : i32, i32, i32
  }
  func.func @transform_1(%arg0: i32, %arg1: i32, %arg2: i32) -> (i32, i32, i32) {
    %c0_i32 = arith.constant 0 : i32
    %c0_i32_0 = arith.constant 0 : i32
    return %arg0, %arg2, %c0_i32 : i32, i32, i32
  }
  func.func @transform_2(%arg0: i32, %arg1: i32, %arg2: i32) -> (i32, i32, i32) {
    %c0_i32 = arith.constant 0 : i32
    %c0_i32_0 = arith.constant 0 : i32
    return %arg0, %arg2, %c0_i32 : i32, i32, i32
  }
  func.func @transform_3(%arg0: i32, %arg1: i32, %arg2: i32) -> (i32, i32, i32) {
    %c0_i32 = arith.constant 0 : i32
    %c0_i32_0 = arith.constant 0 : i32
    return %arg0, %arg1, %c0_i32 : i32, i32, i32
  }
}

</mosaic_0001>

<llo_original>
// kernel: tpu_custom_call.1
$region0: #{tpu_custom_call.1}
  #allocation0 [shape = 'u32[]', space=smem, size = 0x4, offset = 0x4, fixed_abs, tag = 'smem constant byte address 0x4 - core index']
  #allocation1 [shape = 'u32[144,128]{1,0:T(1,128)}', space=vmem, size = 0x12000, scoped, tag = 'internal scratch']
  #allocation2 [shape = 'f32[2,8,1]{2,1,0:T(8,128)}', space=vmem, size = 0x2000, scoped, tag = 'scratch operand']
  #allocation3 [shape = 'f32[2,8,1]{2,1,0:T(8,128)}', space=vmem, size = 0x2000, scoped, tag = 'scratch operand']
  #allocation4 [shape = 'f32[2,8,32]{2,1,0:T(8,128)}', space=vmem, size = 0x2000, scoped, tag = 'scratch operand']
  #allocation5 [shape = 'bf16[2,8,32]{2,1,0:T(8,128)(2,1)}', space=vmem, size = 0x1000, scoped, tag = 'scratch operand']
  %s0 = inlined_call_operand.hbm [shape: f32[4,8,32], index: 0, kind: input, shape index: {}]
  %s1 = inlined_call_operand.hbm [shape: f32[4,8,32], index: 1, kind: input, shape index: {}]
  %s2 = inlined_call_operand.hbm [shape: f32[4,8,32], index: 2, kind: input, shape index: {}]
  %s3 = inlined_call_operand.hbm [shape: f32[2,8,64], index: 3, kind: output, shape index: {}]
  %s4 = sld [smem:[#allocation0]]
  $region65: #{tpu_custom_call.1} parent=0
    _
  %s6 = ssub.s32 1, %s4
  %s7 = scalar_select 0, %s6, %s4
  $region1: #{tpu_custom_call.1} parent=0
    #allocation6 [shape = 'u8[16384]{0}', space=vmem, size = 0x4000, scoped, tag = 'input window, operand 0']
    #allocation7 [shape = 's32[2]{0}', space=sflag, size = 0x8, scoped, tag = 'scoped memory for tpu_custom_call.1']
    #allocation8 [shape = 's32[2]{0}', space=sflag, size = 0x8, scoped, tag = 'scoped memory for tpu_custom_call.1']
    #allocation9 [shape = 'u8[16384]{0}', space=vmem, size = 0x4000, scoped, tag = 'input window, operand 1']
    #allocation10 [shape = 's32[2]{0}', space=sflag, size = 0x8, scoped, tag = 'scoped memory for tpu_custom_call.1']
    #allocation11 [shape = 'u8[16384]{0}', space=vmem, size = 0x4000, scoped, tag = 'input window, operand 2']
    #allocation12 [shape = 'u8[8192]{0}', space=vmem, size = 0x2000, scoped, tag = 'output window, operand 0']
    %8 = vsyncpa [#allocation7], 0
    %s9 = scalar_lea.sflag [#allocation7], 1
    %10 = vsyncpa %s9, 0
    %11 = vsyncpa [#allocation10], 0
    %s12 = scalar_lea.sflag [#allocation10], 1
    %13 = vsyncpa %s12, 0
    %14 = vsyncpa [#allocation8], 0
    %s15 = scalar_lea.sflag [#allocation8], 1
    %16 = vsyncpa %s15, 0
    loop: start=0, step=1, limit=4
    $region2: #{tpu_custom_call.1} parent=1 // loop_pre_header
      _
    $region3: #{tpu_custom_call.1} parent=1 // loop_header
      %s18 = sphi 0, %s22
      %p19 = scmp.ge.s32.totalorder %s18, 4
      %s25 = sphi 0, %s44
      %s26 = sphi 0, %s40
      %s27 = sphi 0, %s36
      %s28 = sphi 0, %s25
      %s29 = sphi 0, %s26
      %s30 = sphi 0, %s27
      %s31 = sphi 0, %s28
      %s32 = sphi 0, %s29
      %s33 = sphi 0, %s30
      %s49 = sphi 0, %s51
      %s52 = sphi 0, %s49
      %s53 = sphi 0, %s52
      %s69 = sphi 0, %s53
      %s77 = sphi 0, %s79
      %s80 = sphi 0, %s77
      %s81 = sphi 0, %s80
      %s97 = sphi 0, %s81
      %s105 = sphi 0, %s107
      %s108 = sphi 0, %s105
      %s109 = sphi 0, %s108
      %s125 = sphi 0, %s109
      %s133 = sphi 0, %s135
      %s136 = sphi 0, %s133
      %s137 = sphi 0, %s136
      %s153 = sphi 0, %s137
    $region4: #{tpu_custom_call.1} parent=1 // loop_header_branch
      %21 = sbr.rel (%p19) target = $region8
    $region5: #{tpu_custom_call.1} parent=1 // loop_body
      %s23 = ssub.s32 %s18, 1
      %s24 = ssub.s32 %s18, 2
      %s34 = sadd.s32 1, %s27
      %p35 = scmp.ge.s32.totalorder %s34, 1
      %s36 = scalar_select %p35, 0, %s34
      %s37 = sadd.s32 1, %s26
      %s38 = scalar_select %p35, %s37, %s26
      %p39 = scmp.ge.s32.totalorder %s38, 1
      %s40 = scalar_select %p39, 0, %s38
      %s41 = sadd.s32 1, %s25
      %s42 = scalar_select %p39, %s41, %s25
      %p43 = scmp.ge.s32.totalorder %s42, 2
      %s44 = scalar_select %p43, 0, %s42
      %s45 = ssub.s32 %s25, %s44
      %s46 = ssub.s32 %s26, %s40
      %s47 = sor.u32 %s45, %s46
      %p48 = scmp.eq.s32.totalorder %s47, 0
      %s50 = sadd.s32 %s49, 1
      %s51 = scalar_select %p48, %s49, %s50
      %p54 = pneg %p48
      %p55 = scmp.eq.s32.totalorder %s18, 1
      %p56 = por %p54, %p55
      %p57 = scmp.ne.s32.totalorder %s49, %s52
      %p58 = scmp.eq.s32.totalorder %s18, 0
      %p59 = por %p57, %p58
      %p60 = scmp.ne.s32.totalorder %s49, %s52
      %p61 = scmp.eq.s32.totalorder %s23, 1
      %p62 = por %p60, %p61
      %p63 = scmp.ne.s32.totalorder %s52, %s53
      %p64 = scmp.eq.s32.totalorder %s23, 0
      %p65 = por %p63, %p64
      %p66 = scmp.ne.s32.totalorder %s52, %s53
      %p67 = scmp.eq.s32.totalorder %s24, 1
      %p68 = por %p66, %p67
      %p70 = scmp.ne.s32.totalorder %s53, %s69
      %p71 = scmp.eq.s32.totalorder %s24, 0
      %p72 = por %p70, %p71
      %s73 = ssub.s32 %s25, %s44
      %s74 = ssub.s32 %s27, %s36
      %s75 = sor.u32 %s73, %s74
      %p76 = scmp.eq.s32.totalorder %s75, 0
      %s78 = sadd.s32 %s77, 1
      %s79 = scalar_select %p76, %s77, %s78
      %p82 = pneg %p76
      %p83 = scmp.eq.s32.totalorder %s18, 1
      %p84 = por %p82, %p83
      %p85 = scmp.ne.s32.totalorder %s77, %s80
      %p86 = scmp.eq.s32.totalorder %s18, 0
      %p87 = por %p85, %p86
      %p88 = scmp.ne.s32.totalorder %s77, %s80
      %p89 = scmp.eq.s32.totalorder %s23, 1
      %p90 = por %p88, %p89
      %p91 = scmp.ne.s32.totalorder %s80, %s81
      %p92 = scmp.eq.s32.totalorder %s23, 0
      %p93 = por %p91, %p92
      %p94 = scmp.ne.s32.totalorder %s80, %s81
      %p95 = scmp.eq.s32.totalorder %s24, 1
      %p96 = por %p94, %p95
      %p98 = scmp.ne.s32.totalorder %s81, %s97
      %p99 = scmp.eq.s32.totalorder %s24, 0
      %p100 = por %p98, %p99
      %s101 = ssub.s32 %s25, %s44
      %s102 = ssub.s32 %s27, %s36
      %s103 = sor.u32 %s101, %s102
      %p104 = scmp.eq.s32.totalorder %s103, 0
      %s106 = sadd.s32 %s105, 1
      %s107 = scalar_select %p104, %s105, %s106
      %p110 = pneg %p104
      %p111 = scmp.eq.s32.totalorder %s18, 1
      %p112 = por %p110, %p111
      %p113 = scmp.ne.s32.totalorder %s105, %s108
      %p114 = scmp.eq.s32.totalorder %s18, 0
      %p115 = por %p113, %p114
      %p116 = scmp.ne.s32.totalorder %s105, %s108
      %p117 = scmp.eq.s32.totalorder %s23, 1
      %p118 = por %p116, %p117
      %p119 = scmp.ne.s32.totalorder %s108, %s109
      %p120 = scmp.eq.s32.totalorder %s23, 0
      %p121 = por %p119, %p120
      %p122 = scmp.ne.s32.totalorder %s108, %s109
      %p123 = scmp.eq.s32.totalorder %s24, 1
      %p124 = por %p122, %p123
      %p126 = scmp.ne.s32.totalorder %s109, %s125
      %p127 = scmp.eq.s32.totalorder %s24, 0
      %p128 = por %p126, %p127
      %s129 = ssub.s32 %s25, %s44
      %s130 = ssub.s32 %s26, %s40
      %s131 = sor.u32 %s129, %s130
      %p132 = scmp.eq.s32.totalorder %s131, 0
      %s134 = sadd.s32 %s133, 1
      %s135 = scalar_select %p132, %s133, %s134
      %p138 = pneg %p132
      %p139 = scmp.eq.s32.totalorder %s18, 1
      %p140 = por %p138, %p139
      %p141 = scmp.ne.s32.totalorder %s133, %s136
      %p142 = scmp.eq.s32.totalorder %s18, 0
      %p143 = por %p141, %p142
      %p144 = scmp.ne.s32.totalorder %s133, %s136
      %p145 = scmp.eq.s32.totalorder %s23, 1
      %p146 = por %p144, %p145
      %p147 = scmp.ne.s32.totalorder %s136, %s137
      %p148 = scmp.eq.s32.totalorder %s23, 0
      %p149 = por %p147, %p148
      %p150 = scmp.ne.s32.totalorder %s136, %s137
      %p151 = scmp.eq.s32.totalorder %s24, 1
      %p152 = por %p150, %p151
      %p154 = scmp.ne.s32.totalorder %s137, %s153
      %p155 = scmp.eq.s32.totalorder %s24, 0
      %p156 = por %p154, %p155
      %p157 = scmp.le.s32.totalorder 1, %s18
      %p158 = scmp.lt.s32.totalorder %s18, 3
      %p159 = pnand %p157, %p158
      %p160 = pneg %p159
      // Predicated region
      $region9: #{tpu_custom_call.1} parent=5 // pred_check
        _
      $region10: #{tpu_custom_call.1} parent=5 // pred_check_branch
        %162 = sbr.rel (%p159) target = $region12
      $region11: #{tpu_custom_call.1} parent=5 // pred_region
        %s163 = ssub.s32 %s18, 1
      $region12: #{tpu_custom_call.1} parent=5 // pred_fallthru
        _
      %p164 = scmp.lt.s32.totalorder %s18, 2
      // Predicated region
      $region13: #{tpu_custom_call.1} parent=5 // pred_check
        %p165 = pneg %p164
      $region14: #{tpu_custom_call.1} parent=5 // pred_check_branch
        %167 = sbr.rel (%p165) target = $region16
      $region15: #{tpu_custom_call.1} parent=5 // pred_region
        // Predicated region
        $region17: #{tpu_custom_call.1} parent=15 // pred_check
          %p168 = pneg %p59
        $region18: #{tpu_custom_call.1} parent=15 // pred_check_branch
          %170 = sbr.rel (%p168) target = $region20
        $region19: #{tpu_custom_call.1} parent=15 // pred_region
          %s171 = sand.u32 %s49, 1
          %s172 = scalar_lea.sflag [#allocation7], %s171
          %s173 = sand.u32 %s49, 1
          %s174 = smul.addr %s173, 16
          %s175 = scalar_lea.vmem [#allocation6], %s174
          %s176 = smul.u32 2, %s25
          %s178 = ssub.s32 256, 256
          %179 = vsyncadd %s172, %s178
          %s180 = sadd.s32 %s26, %s176
          %s181 = smul.addr %s180, 128
          %s182 = scalar_lea.hbm %s0, %s181
          %s183 = sshll.u32 %s175, 4
          %s184 = int_to_ptr.vmem [resolvable:$true] %s183
          %189 = dma.hbm_to_vmem [thread:$0]  %s182, 256, %s184, %s172, 128, 128, 8
        $region20: #{tpu_custom_call.1} parent=15 // pred_fallthru
          _
        // Predicated region
        $region21: #{tpu_custom_call.1} parent=15 // pred_check
          %p190 = pneg %p87
        $region22: #{tpu_custom_call.1} parent=15 // pred_check_branch
          %192 = sbr.rel (%p190) target = $region24
        $region23: #{tpu_custom_call.1} parent=15 // pred_region
          %s193 = sand.u32 %s18, 1
          %s194 = scalar_lea.sflag [#allocation10], %s193
          %s195 = sand.u32 %s77, 1
          %s196 = smul.addr %s195, 16
          %s197 = scalar_lea.vmem [#allocation9], %s196
          %s198 = smul.u32 2, %s25
          %s200 = ssub.s32 256, 256
          %201 = vsyncadd %s194, %s200
          %s202 = sadd.s32 %s27, %s198
          %s203 = smul.addr %s202, 128
          %s204 = scalar_lea.hbm %s1, %s203
          %s205 = sshll.u32 %s197, 4
          %s206 = int_to_ptr.vmem [resolvable:$true] %s205
          %211 = dma.hbm_to_vmem [thread:$0]  %s204, 256, %s206, %s194, 128, 128, 8
        $region24: #{tpu_custom_call.1} parent=15 // pred_fallthru
          _
        // Predicated region
        $region25: #{tpu_custom_call.1} parent=15 // pred_check
          %p212 = pneg %p115
        $region26: #{tpu_custom_call.1} parent=15 // pred_check_branch
          %214 = sbr.rel (%p212) target = $region28
        $region27: #{tpu_custom_call.1} parent=15 // pred_region
          %s215 = sand.u32 %s18, 1
          %s216 = scalar_lea.sflag [#allocation10], %s215
          %s217 = sand.u32 %s105, 1
          %s218 = smul.addr %s217, 16
          %s219 = scalar_lea.vmem [#allocation11], %s218
          %s220 = smul.u32 2, %s25
          %s222 = ssub.s32 256, 256
          %223 = vsyncadd %s216, %s222
          %s224 = sadd.s32 %s27, %s220
          %s225 = smul.addr %s224, 128
          %s226 = scalar_lea.hbm %s2, %s225
          %s227 = sshll.u32 %s219, 4
          %s228 = int_to_ptr.vmem [resolvable:$true] %s227
          %233 = dma.hbm_to_vmem [thread:$0]  %s226, 256, %s228, %s216, 128, 128, 8
        $region28: #{tpu_custom_call.1} parent=15 // pred_fallthru
          _
      $region16: #{tpu_custom_call.1} parent=5 // pred_fallthru
        _
      %p234 = scmp.le.s32.totalorder 1, %s18
      %p235 = scmp.lt.s32.totalorder %s18, 3
      %p236 = pnand %p234, %p235
      %p237 = pneg %p236
      // Predicated region
      $region29: #{tpu_custom_call.1} parent=5 // pred_check
        _
      $region30: #{tpu_custom_call.1} parent=5 // pred_check_branch
        %239 = sbr.rel (%p236) target = $region32
      $region31: #{tpu_custom_call.1} parent=5 // pred_region
        %s240 = ssub.s32 %s18, 1
        %s241 = sand.u32 %s52, 1
        %s242 = scalar_lea.sflag [#allocation7], %s241
        %s243 = sand.u32 %s52, 1
        %s244 = smul.addr %s243, 16
        %s245 = scalar_lea.vmem [#allocation6], %s244
        // Predicated region
        $region33: #{tpu_custom_call.1} parent=31 // pred_check
          %p246 = pneg %p65
        $region34: #{tpu_custom_call.1} parent=31 // pred_check_branch
          %248 = sbr.rel (%p246) target = $region36
        $region35: #{tpu_custom_call.1} parent=31 // pred_region
          %249 = dma.done %s242, 256
        $region36: #{tpu_custom_call.1} parent=31 // pred_fallthru
          _
        %s250 = sand.u32 %s23, 1
        %s251 = scalar_lea.sflag [#allocation10], %s250
        %s252 = sand.u32 %s80, 1
        %s253 = smul.addr %s252, 16
        %s254 = scalar_lea.vmem [#allocation9], %s253
        // Predicated region
        $region37: #{tpu_custom_call.1} parent=31 // pred_check
          %p255 = pneg %p93
        $region38: #{tpu_custom_call.1} parent=31 // pred_check_branch
          %257 = sbr.rel (%p255) target = $region40
        $region39: #{tpu_custom_call.1} parent=31 // pred_region
          %258 = dma.done %s251, 256
        $region40: #{tpu_custom_call.1} parent=31 // pred_fallthru
          _
        %s259 = sand.u32 %s23, 1
        %s260 = scalar_lea.sflag [#allocation10], %s259
        %s261 = sand.u32 %s108, 1
        %s262 = smul.addr %s261, 16
        %s263 = scalar_lea.vmem [#allocation11], %s262
        // Predicated region
        $region41: #{tpu_custom_call.1} parent=31 // pred_check
          %p264 = pneg %p121
        $region42: #{tpu_custom_call.1} parent=31 // pred_check_branch
          %266 = sbr.rel (%p264) target = $region44
        $region43: #{tpu_custom_call.1} parent=31 // pred_region
          %267 = dma.done %s260, 256
        $region44: #{tpu_custom_call.1} parent=31 // pred_fallthru
          _
        %s268 = sand.u32 %s52, 1
        %s269 = scalar_lea.sflag [#allocation7], %s268
        %s270 = sand.u32 %s52, 1
        %s271 = smul.addr %s270, 16
        %s272 = scalar_lea.vmem [#allocation6], %s271
        %p273 = pneg %p65
        %p274 = pneg %p62
        %s275 = sand.u32 %s23, 1
        %s276 = scalar_lea.sflag [#allocation10], %s275
        %s277 = sand.u32 %s80, 1
        %s278 = smul.addr %s277, 16
        %s279 = scalar_lea.vmem [#allocation9], %s278
        %p280 = pneg %p93
        %p281 = pneg %p90
        %s282 = sand.u32 %s23, 1
        %s283 = scalar_lea.sflag [#allocation10], %s282
        %s284 = sand.u32 %s108, 1
        %s285 = smul.addr %s284, 16
        %s286 = scalar_lea.vmem [#allocation11], %s285
        %p287 = pneg %p121
        %p288 = pneg %p118
        %p289 = pneg %p149
        %p290 = pneg %p146
        %s291 = sand.u32 %s136, 1
        %s292 = scalar_lea.sflag [#allocation8], %s291
        %s293 = sand.u32 %s136, 1
        %s294 = smul.addr %s293, 8
        %s295 = scalar_lea.vmem [#allocation12], %s294
        %s296 = smul.u32 2, %s28
        %s297 = smul.u32 2, %s28
        %s298 = smul.u32 2, %s28
        %p300 = scmp.eq.s32.totalorder %s30, 0
        // Predicated region
        $region45: #{tpu_custom_call.1} parent=31 // pred_check
          %p301 = pneg %p300
        $region46: #{tpu_custom_call.1} parent=31 // pred_check_branch
          %303 = sbr.rel (%p301) target = $region48
        $region47: #{tpu_custom_call.1} parent=31 // pred_region
          %vm304 = vcmask 7168
          %305 = vst.msk [vmem:[#allocation2] sm:$0xff] %vm304, -2.3819763e+38
          %306 = vst.msk [vmem:[#allocation2 + $0x8] sm:$0xff] %vm304, -2.3819763e+38
          %307 = vst.msk [vmem:[#allocation3] sm:$0xff] %vm304, 0.0
          %308 = vst.msk [vmem:[#allocation3 + $0x8] sm:$0xff] %vm304, 0.0
          %vm309 = vcmask 261120
          %310 = vst.msk [vmem:[#allocation4] sm:$0xff] %vm309, 0.0
          %311 = vst.msk [vmem:[#allocation4 + $0x8] sm:$0xff] %vm309, 0.0
          %v312 = vld [vmem:[%s245] sm:$0xff]
          %v313 = vld [vmem:[%s245 + $0x8] sm:$0xff]
          %v314 = vmul.f32 %v312, 0.17677669
          %v315 = vmul.f32 %v313, 0.17677669
          %v316 = vpack.c.bf16 %v314, %v314
          %v317 = vpack.c.bf16 %v315, %v315
          %vm318 = vcmask 257024
          %319 = vst.msk [vmem:[#allocation5] sm:$0xf] %vm318, %v316
          %320 = vst.msk [vmem:[#allocation5 + $0x4] sm:$0xf] %vm318, %v317
        $region48: #{tpu_custom_call.1} parent=31 // pred_fallthru
          _
        %v321 = vld [vmem:[#allocation5] sm:$0xf]
        %v322 = vld [vmem:[#allocation5 + $0x4] sm:$0xf]
        %v323 = vld [vmem:[%s254] sm:$0xff]
        %v324 = vld [vmem:[%s254 + $0x8] sm:$0xff]
        %v325 = vpack.c.bf16 %v323, %v323
        %v326 = vpack.c.bf16 %v324, %v324
        %vm327 = vcmask 261120
        %v329 = vsel %vm327, %v321, 0
        %v332 = vsel %vm327, %v325, 0
        %334 = vmatprep.subr.bf16.mxu0 0
        %335 = vmatpush1.bf16.xpose.msra.mxu0 %v332
        %336 = vmatprep.subr.bf16.mxu0 0
        %337 = vmatpush1.bf16.xpose.msra.mxu0 0
        %338 = vmatprep.subr.bf16.mxu0 0
        %339 = vmatpush1.bf16.xpose.msra.mxu0 0
        %340 = vmatprep.subr.bf16.mxu0 0
        %341 = vmatpush1.bf16.xpose.msra.mxu0 0
        %342 = vmatprep.subr.bf16.mxu0 0
        %343 = vmatpush1.bf16.xpose.msra.mxu0 0
        %344 = vmatprep.subr.bf16.mxu0 0
        %345 = vmatpush1.bf16.xpose.msra.mxu0 0
        %346 = vmatprep.subr.bf16.mxu0 0
        %347 = vmatpush1.bf16.xpose.msra.mxu0 0
        %348 = vmatprep.subr.bf16.mxu0 0
        %349 = vmatpush1.bf16.xpose.msra.mxu0 0
        %350 = vmatprep.subr.bf16.mxu0 0
        %351 = vmatpush1.bf16.xpose.msra.mxu0 0
        %352 = vmatprep.subr.bf16.mxu0 0
        %353 = vmatpush1.bf16.xpose.msra.mxu0 0
        %354 = vmatprep.subr.bf16.mxu0 0
        %355 = vmatpush1.bf16.xpose.msra.mxu0 0
        %356 = vmatprep.subr.bf16.mxu0 0
        %357 = vmatpush1.bf16.xpose.msra.mxu0 0
        %358 = vmatprep.subr.bf16.mxu0 0
        %359 = vmatpush1.bf16.xpose.msra.mxu0 0
        %360 = vmatprep.subr.bf16.mxu0 0
        %361 = vmatpush1.bf16.xpose.msra.mxu0 0
        %362 = vmatprep.subr.bf16.mxu0 0
        %363 = vmatpush1.bf16.xpose.msra.mxu0 0
        %364 = vmatprep.subr.bf16.mxu0 0
        %365 = vmatpush1.bf16.xpose.msra.mxu0 0
        %366 = vmatprep.mubr.bf16.mxu0 0
        %367 = vmatmul.mubr.bf16.gmra.mrb[0].mxu0 %v329
        %v368 = vpop.f32.mrb[0].mxu0
        %v369 = vadd.f32 0.0, %v368
        %v370 = vpop.f32.mrb[0].mxu0
        %v371 = vpop.f32.mrb[0].mxu0
        %v372 = vpop.f32.mrb[0].mxu0
        %373 = vdwg.mxu0
        %v375 = vsel %vm327, %v322, 0
        %v378 = vsel %vm327, %v326, 0
        %380 = vmatprep.subr.bf16.mxu0 0
        %381 = vmatpush1.bf16.xpose.msra.mxu0 %v378
        %382 = vmatprep.subr.bf16.mxu0 0
        %383 = vmatpush1.bf16.xpose.msra.mxu0 0
        %384 = vmatprep.subr.bf16.mxu0 0
        %385 = vmatpush1.bf16.xpose.msra.mxu0 0
        %386 = vmatprep.subr.bf16.mxu0 0
        %387 = vmatpush1.bf16.xpose.msra.mxu0 0
        %388 = vmatprep.subr.bf16.mxu0 0
        %389 = vmatpush1.bf16.xpose.msra.mxu0 0
        %390 = vmatprep.subr.bf16.mxu0 0
        %391 = vmatpush1.bf16.xpose.msra.mxu0 0
        %392 = vmatprep.subr.bf16.mxu0 0
        %393 = vmatpush1.bf16.xpose.msra.mxu0 0
        %394 = vmatprep.subr.bf16.mxu0 0
        %395 = vmatpush1.bf16.xpose.msra.mxu0 0
        %396 = vmatprep.subr.bf16.mxu0 0
        %397 = vmatpush1.bf16.xpose.msra.mxu0 0
        %398 = vmatprep.subr.bf16.mxu0 0
        %399 = vmatpush1.bf16.xpose.msra.mxu0 0
        %400 = vmatprep.subr.bf16.mxu0 0
        %401 = vmatpush1.bf16.xpose.msra.mxu0 0
        %402 = vmatprep.subr.bf16.mxu0 0
        %403 = vmatpush1.bf16.xpose.msra.mxu0 0
        %404 = vmatprep.subr.bf16.mxu0 0
        %405 = vmatpush1.bf16.xpose.msra.mxu0 0
        %406 = vmatprep.subr.bf16.mxu0 0
        %407 = vmatpush1.bf16.xpose.msra.mxu0 0
        %408 = vmatprep.subr.bf16.mxu0 0
        %409 = vmatpush1.bf16.xpose.msra.mxu0 0
        %410 = vmatprep.subr.bf16.mxu0 0
        %411 = vmatpush1.bf16.xpose.msra.mxu0 0
        %412 = vmatprep.mubr.bf16.mxu0 0
        %413 = vmatmul.mubr.bf16.gmra.mrb[0].mxu0 %v375
        %v414 = vpop.f32.mrb[0].mxu0
        %v415 = vadd.f32 0.0, %v414
        %v416 = vpop.f32.mrb[0].mxu0
        %v417 = vpop.f32.mrb[0].mxu0
        %v418 = vpop.f32.mrb[0].mxu0
        %419 = vdwg.mxu0
        %v420 = vld [vmem:[#allocation2] sm:$0xff]
        %v421 = vld [vmem:[#allocation2 + $0x8] sm:$0xff]
        %vm422 = vcmask 64512
        %v423 = vsel %vm422, %v369, -inf
        %424 = vmax.xlane.f32.xlu0 %v423
        %v425 = vpop.xlane.xlu0 %424
        %v426 = vsel %vm422, %v415, -inf
        %427 = vmax.xlane.f32.xlu0 %v426
        %v428 = vpop.xlane.xlu0 %427
        %v429 = vmax.f32 %v420, %v425
        %v430 = vmax.f32 %v421, %v428
        %v431 = vsub.f32 %v420, %v429
        %v432 = vsub.f32 %v421, %v430
        %v433 = vmul.f32 %v431, 1.442695
        %v434 = vpow.pop %v433
        %v435 = vmul.f32 %v432, 1.442695
        %v436 = vpow.pop %v435
        %438 = vset.pattern.permute.xlu0 0
        %439 = vperm.xlu0 %438, %v429
        %v440 = vpop.permute.xlu0 %439
        %443 = vset.pattern.permute.xlu0 0
        %444 = vperm.xlu0 %443, %v430
        %v445 = vpop.permute.xlu0 %444
        %v447 = vsub.f32 %v369, %v440
        %v448 = vsub.f32 %v415, %v445
        %v449 = vmul.f32 %v447, 1.442695
        %v450 = vpow.pop %v449
        %v451 = vmul.f32 %v448, 1.442695
        %v452 = vpow.pop %v451
        %v453 = vld [vmem:[#allocation3] sm:$0xff]
        %v454 = vld [vmem:[#allocation3 + $0x8] sm:$0xff]
        %v455 = vmul.f32 %v434, %v453
        %v456 = vmul.f32 %v436, %v454
        %v457 = vsel %vm422, %v450, 0.0
        %458 = vadd.xlane.f32.xlu0 %v457
        %v459 = vpop.xlane.xlu0 %458
        %v460 = vsel %vm422, %v452, 0.0
        %461 = vadd.xlane.f32.xlu0 %v460
        %v462 = vpop.xlane.xlu0 %461
        %v463 = vadd.f32 %v455, %v459
        %v464 = vadd.f32 %v456, %v462
        %vm465 = vcmask 7168
        %466 = vst.msk [vmem:[#allocation3] sm:$0xff] %vm465, %v463
        %467 = vst.msk [vmem:[#allocation3 + $0x8] sm:$0xff] %vm465, %v464
        %v468 = vld [vmem:[#allocation4] sm:$0xff]
        %v469 = vld [vmem:[#allocation4 + $0x8] sm:$0xff]
        %471 = vset.pattern.permute.xlu0 0
        %472 = vperm.xlu0 %471, %v434
        %v473 = vpop.permute.xlu0 %472
        %476 = vset.pattern.permute.xlu0 0
        %477 = vperm.xlu0 %476, %v436
        %v478 = vpop.permute.xlu0 %477
        %v480 = vmul.f32 %v473, %v468
        %v481 = vmul.f32 %v478, %v469
        %v482 = vpack.c.bf16 %v450, %v450
        %v483 = vpack.c.bf16 %v452, %v452
        %v484 = vld [vmem:[%s263] sm:$0xff]
        %v485 = vld [vmem:[%s263 + $0x8] sm:$0xff]
        %v486 = vpack.c.bf16 %v484, %v484
        %v487 = vpack.c.bf16 %v485, %v485
        %v489 = vsel %vm422, %v482, 0
        %vm491 = vcmask 1043456
        %v493 = vsel %vm491, %v486, 0
        %495 = vmatprep.subr.bf16.mxu0 0
        %496 = vmatpush1.bf16.msra.mxu0 %v493
        %497 = vmatprep.subr.bf16.mxu0 0
        %498 = vmatpush1.bf16.msra.mxu0 0
        %499 = vmatprep.subr.bf16.mxu0 0
        %500 = vmatpush1.bf16.msra.mxu0 0
        %501 = vmatprep.subr.bf16.mxu0 0
        %502 = vmatpush1.bf16.msra.mxu0 0
        %503 = vmatprep.subr.bf16.mxu0 0
        %504 = vmatpush1.bf16.msra.mxu0 0
        %505 = vmatprep.subr.bf16.mxu0 0
        %506 = vmatpush1.bf16.msra.mxu0 0
        %507 = vmatprep.subr.bf16.mxu0 0
        %508 = vmatpush1.bf16.msra.mxu0 0
        %509 = vmatprep.subr.bf16.mxu0 0
        %510 = vmatpush1.bf16.msra.mxu0 0
        %511 = vmatprep.subr.bf16.mxu0 0
        %512 = vmatpush1.bf16.msra.mxu0 0
        %513 = vmatprep.subr.bf16.mxu0 0
        %514 = vmatpush1.bf16.msra.mxu0 0
        %515 = vmatprep.subr.bf16.mxu0 0
        %516 = vmatpush1.bf16.msra.mxu0 0
        %517 = vmatprep.subr.bf16.mxu0 0
        %518 = vmatpush1.bf16.msra.mxu0 0
        %519 = vmatprep.subr.bf16.mxu0 0
        %520 = vmatpush1.bf16.msra.mxu0 0
        %521 = vmatprep.subr.bf16.mxu0 0
        %522 = vmatpush1.bf16.msra.mxu0 0
        %523 = vmatprep.subr.bf16.mxu0 0
        %524 = vmatpush1.bf16.msra.mxu0 0
        %525 = vmatprep.subr.bf16.mxu0 0
        %526 = vmatpush1.bf16.msra.mxu0 0
        %527 = vmatprep.mubr.bf16.mxu0 0
        %528 = vmatmul.mubr.bf16.gmra.mrb[0].mxu0 %v489
        %v529 = vpop.f32.mrb[0].mxu0
        %v530 = vadd.f32 0.0, %v529
        %v531 = vpop.f32.mrb[0].mxu0
        %v532 = vpop.f32.mrb[0].mxu0
        %v533 = vpop.f32.mrb[0].mxu0
        %534 = vdwg.mxu0
        %v536 = vsel %vm422, %v483, 0
        %v539 = vsel %vm491, %v487, 0
        %541 = vmatprep.subr.bf16.mxu0 0
        %542 = vmatpush1.bf16.msra.mxu0 %v539
        %543 = vmatprep.subr.bf16.mxu0 0
        %544 = vmatpush1.bf16.msra.mxu0 0
        %545 = vmatprep.subr.bf16.mxu0 0
        %546 = vmatpush1.bf16.msra.mxu0 0
        %547 = vmatprep.subr.bf16.mxu0 0
        %548 = vmatpush1.bf16.msra.mxu0 0
        %549 = vmatprep.subr.bf16.mxu0 0
        %550 = vmatpush1.bf16.msra.mxu0 0
        %551 = vmatprep.subr.bf16.mxu0 0
        %552 = vmatpush1.bf16.msra.mxu0 0
        %553 = vmatprep.subr.bf16.mxu0 0
        %554 = vmatpush1.bf16.msra.mxu0 0
        %555 = vmatprep.subr.bf16.mxu0 0
        %556 = vmatpush1.bf16.msra.mxu0 0
        %557 = vmatprep.subr.bf16.mxu0 0
        %558 = vmatpush1.bf16.msra.mxu0 0
        %559 = vmatprep.subr.bf16.mxu0 0
        %560 = vmatpush1.bf16.msra.mxu0 0
        %561 = vmatprep.subr.bf16.mxu0 0
        %562 = vmatpush1.bf16.msra.mxu0 0
        %563 = vmatprep.subr.bf16.mxu0 0
        %564 = vmatpush1.bf16.msra.mxu0 0
        %565 = vmatprep.subr.bf16.mxu0 0
        %566 = vmatpush1.bf16.msra.mxu0 0
        %567 = vmatprep.subr.bf16.mxu0 0
        %568 = vmatpush1.bf16.msra.mxu0 0
        %569 = vmatprep.subr.bf16.mxu0 0
        %570 = vmatpush1.bf16.msra.mxu0 0
        %571 = vmatprep.subr.bf16.mxu0 0
        %572 = vmatpush1.bf16.msra.mxu0 0
        %573 = vmatprep.mubr.bf16.mxu0 0
        %574 = vmatmul.mubr.bf16.gmra.mrb[0].mxu0 %v536
        %v575 = vpop.f32.mrb[0].mxu0
        %v576 = vadd.f32 0.0, %v575
        %v577 = vpop.f32.mrb[0].mxu0
        %v578 = vpop.f32.mrb[0].mxu0
        %v579 = vpop.f32.mrb[0].mxu0
        %580 = vdwg.mxu0
        %v581 = vadd.f32 %v480, %v530
        %v582 = vadd.f32 %v481, %v576
        %583 = vst.msk [vmem:[#allocation4] sm:$0xff] %vm327, %v581
        %584 = vst.msk [vmem:[#allocation4 + $0x8] sm:$0xff] %vm327, %v582
        %585 = vst.msk [vmem:[#allocation2] sm:$0xff] %vm465, %v429
        %586 = vst.msk [vmem:[#allocation2 + $0x8] sm:$0xff] %vm465, %v430
        // Predicated region
        $region49: #{tpu_custom_call.1} parent=31 // pred_check
          %p587 = pneg %p300
        $region50: #{tpu_custom_call.1} parent=31 // pred_check_branch
          %589 = sbr.rel (%p587) target = $region52
        $region51: #{tpu_custom_call.1} parent=31 // pred_region
          %v590 = vld [vmem:[#allocation3] sm:$0xff]
          %v591 = vld [vmem:[#allocation3 + $0x8] sm:$0xff]
          %v592 = vrcp.pop %v590
          %v593 = vmul.f32 1.0, %v592
          %v594 = vrcp.pop %v591
          %v595 = vmul.f32 1.0, %v594
          %v596 = vld [vmem:[#allocation4] sm:$0xff]
          %v597 = vld [vmem:[#allocation4 + $0x8] sm:$0xff]
          %599 = vset.pattern.permute.xlu0 0
          %600 = vperm.xlu0 %599, %v593
          %v601 = vpop.permute.xlu0 %600
          %604 = vset.pattern.permute.xlu0 0
          %605 = vperm.xlu0 %604, %v595
          %v606 = vpop.permute.xlu0 %605
          %v608 = vmul.f32 %v596, %v601
          %v609 = vmul.f32 %v597, %v606
          %610 = vst.msk [vmem:[%s295] sm:$0xff] %vm327, %v608
          %612 = vrot.lane.b32.xlu0 %v609, 32
          %v613 = vpop.permute.xlu0 %612
          %vm615 = vcmask 523520
          %616 = vst.msk [vmem:[%s295] sm:$0xff] %vm615, %v613
        $region52: #{tpu_custom_call.1} parent=31 // pred_fallthru
          _
        %s617 = sand.u32 %s136, 1
        %s618 = scalar_lea.sflag [#allocation8], %s617
        %s619 = sand.u32 %s136, 1
        %s620 = smul.addr %s619, 8
        %s621 = scalar_lea.vmem [#allocation12], %s620
        // Predicated region
        $region53: #{tpu_custom_call.1} parent=31 // pred_check
          %p622 = pneg %p146
        $region54: #{tpu_custom_call.1} parent=31 // pred_check_branch
          %624 = sbr.rel (%p622) target = $region56
        $region55: #{tpu_custom_call.1} parent=31 // pred_region
          %s626 = ssub.s32 128, 128
          %627 = vsyncadd %s618, %s626
          %s628 = sadd.s32 %s29, %s28
          %s629 = smul.addr %s628, 128
          %s630 = scalar_lea.hbm %s3, %s629
          %s632 = sshll.u32 %s621, 4
          %s633 = int_to_ptr.vmem [resolvable:$true] %s632
          %635 = dma.vmem_to_hbm [thread:$0]  %s633, 128, %s630, %s618
        $region56: #{tpu_custom_call.1} parent=31 // pred_fallthru
          _
      $region32: #{tpu_custom_call.1} parent=5 // pred_fallthru
        _
      %p636 = scmp.le.s32.totalorder 2, %s18
      // Predicated region
      $region57: #{tpu_custom_call.1} parent=5 // pred_check
        %p637 = pneg %p636
      $region58: #{tpu_custom_call.1} parent=5 // pred_check_branch
        %639 = sbr.rel (%p637) target = $region60
      $region59: #{tpu_custom_call.1} parent=5 // pred_region
        %s640 = ssub.s32 %s18, 2
        // Predicated region
        $region61: #{tpu_custom_call.1} parent=59 // pred_check
          %p641 = pneg %p152
        $region62: #{tpu_custom_call.1} parent=59 // pred_check_branch
          %643 = sbr.rel (%p641) target = $region64
        $region63: #{tpu_custom_call.1} parent=59 // pred_region
          %s644 = sand.u32 %s137, 1
          %s645 = scalar_lea.sflag [#allocation8], %s644
          %s646 = sand.u32 %s137, 1
          %s647 = smul.addr %s646, 8
          %s648 = scalar_lea.vmem [#allocation12], %s647
          %649 = dma.done %s645, 128
        $region64: #{tpu_custom_call.1} parent=59 // pred_fallthru
          _
      $region60: #{tpu_custom_call.1} parent=5 // pred_fallthru
        _
    $region6: #{tpu_custom_call.1} parent=1 // loop_footer
      %s22 = sadd.s32 1, %s18
    $region7: #{tpu_custom_call.1} parent=1 // loop_footer_branch
      %17 = sbr.rel target = $region3
    $region8: #{tpu_custom_call.1} parent=1 // loop_exit
      _
    %650 = vsyncpa [#allocation7], 1
    %s651 = scalar_lea.sflag [#allocation7], 1
    %652 = vsyncpa %s651, 1
    %653 = vsyncpa [#allocation10], 1
    %s654 = scalar_lea.sflag [#allocation10], 1
    %655 = vsyncpa %s654, 1
    %656 = vsyncpa [#allocation8], 1
    %s657 = scalar_lea.sflag [#allocation8], 1
    %658 = vsyncpa %s657, 1

</llo_original>
